<compile_context>
chip_gen: v7x
topology: tpu7x:2x2x1
jax: 0.10.0
libtpu: 0.0.40
codegen_flags: <defaults>
</compile_context>

<pallas_src>
import jax
import jax.numpy as jnp
from jax.experimental import pallas as pl
from jax.experimental.pallas import tpu as pltpu

_SUBLANE = 8
_LANE = 128
_ROW_CHUNK = 128     # rows per inner gating chunk (bounds vreg live ranges)


def _round_up(n, m):
    return ((n + m - 1) // m) * m


def _vmem_block_bytes(tile, E, C, in_isz, out_isz):
    """Per-grid-step VMEM footprint, INCLUDING the x2 double-buffer factor."""
    x_blk = tile * _round_up(E, _LANE) * in_isz
    out_blk = tile * _round_up(C * E, _LANE) * out_isz
    sat_blk = tile * _round_up(C, _LANE) * in_isz
    w_blk = _round_up(E, _SUBLANE) * _round_up(C, _LANE) * in_isz
    b_blk = _SUBLANE * _round_up(C, _LANE) * 4
    return 2 * (x_blk + out_blk + sat_blk + w_blk + b_blk)


def _vmem_capacity_bytes():
    """Physical VMEM of the current generation; conservative fallback (v7x)."""
    try:
        return int(pltpu.get_tpu_info().vmem_capacity_bytes)
    except Exception:
        return 64 << 20


def _constraint_kernel(x_ref, wt_ref, b_ref, out_ref, sat_ref):
    # x_ref:   (T, E)     input rows (one tile)
    # wt_ref:  (E, C)     constraint weights, pre-transposed (grid-resident)
    # b_ref:   (1, C)     constraint bias, f32 (grid-resident)
    # out_ref: (T, C*E)   lane-dense gated representations: out[n, c*E + e]
    # sat_ref: (T, C)     sigmoid constraint-satisfaction scores
    tile, E = x_ref.shape
    C = wt_ref.shape[1]

    # Whole-tile scores + sigmoid: one MXU push + one EUP burst per tile
    # (avoids per-chunk MRF-pop / EUP-drain serialization on v5e/v6e) and a
    # single sat store per tile.  C is tiny, so MXU FLOPs are free.
    scores = jnp.dot(x_ref[...], wt_ref[...],
                     preferred_element_type=jnp.float32) + b_ref[...]
    sat_ref[...] = jax.nn.sigmoid(scores).astype(sat_ref.dtype)

    # Gating multiply, chunked over row groups.  Each chunk issues ONE
    # full-width (C*E-lane) store: the C per-constraint products are
    # concatenated along the lane axis in registers (XLU/VPU work, off the
    # store-slot critical path) instead of C masked partial-lane stores.
    chunk = min(tile, _ROW_CHUNK)
    for r0 in range(0, tile, chunk):            # static, fully unrolled
        rows = min(chunk, tile - r0)
        xf = x_ref[pl.ds(r0, rows), :].astype(jnp.float32)        # (rows, E)
        sat_c = sat_ref[pl.ds(r0, rows), :].astype(jnp.float32)   # (rows, C)
        parts = [xf * sat_c[:, c:c + 1] for c in range(C)]
        out_ref[pl.ds(r0, rows), :] = jnp.concatenate(
            parts, axis=1).astype(out_ref.dtype)


def logical_constraint_layer(x, weight, bias, *, row_tile=2048, out_dtype=None,
                             vmem_budget_bytes=24 * 1024 * 1024,
                             out_buffers=2):
    """x: (B, S, E); weight: (C, E); bias: (C,).

    Returns (logically_consistent_x: (B, S, C, E), satisfaction: (B, S, C)).

    out_dtype: dtype of the gated slab.  That write dominates HBM traffic, so
    jnp.bfloat16 (with f32 x) is the recommended setting on bandwidth-poor
    generations (v5e especially, still ~1.7x on v6e); compute and the
    satisfaction output stay f32.  Default matches x.dtype for bit-comparable
    results against a plain-JAX reference.

    out_buffers: output pipeline depth; set to 3 only if a trace shows exposed
    output-writeback DMA on short grids.
    """
    B, S, E = x.shape
    C = weight.shape[0]
    N = B * S
    out_dtype = jnp.dtype(x.dtype if out_dtype is None else out_dtype)
    in_isz = jnp.dtype(x.dtype).itemsize
    out_isz = out_dtype.itemsize

    # Generation-aware scoped-VMEM ceiling: <= 48 MiB on v5e/v6e (128 MiB
    # physical VMEM), <= 32 MiB on v7x (64 MiB physical VMEM).
    vmem_cap_limit = min(48 << 20, _vmem_capacity_bytes() // 2)
    budget = min(vmem_budget_bytes, vmem_cap_limit - (4 << 20))

    # Row alignment for the tiled (row) axis: 8 sublanes for 32-bit, 16 for
    # 16-bit, 32 for 8-bit dtypes (covers both the input and the output slab).
    row_align = max(_SUBLANE, 32 // in_isz, 32 // out_isz)

    # ---- row-tile selection -------------------------------------------------
    tile = min(_round_up(row_tile, row_align), _round_up(N, row_align))
    tile = max(tile, row_align)
    while tile > row_align and _vmem_block_bytes(
            tile, E, C, in_isz, out_isz) > budget:
        tile = _round_up(max(tile // 2, row_align), row_align)
    # >= 4 grid steps when there is enough work: 2+ steps per TensorCore on a
    # v7x megacore (and >= 2 on single-core chips) so writeback DMA of step
    # i-1 hides behind compute of step i on every core.
    if N >= 4 * row_align and pl.cdiv(N, tile) < 4:
        tile = _round_up(pl.cdiv(N, 4), row_align)

    grid = (pl.cdiv(N, tile),)   # ragged tail handled by Pallas masked last block

    # ---- operand preparation (no padding, no output slicing) ---------------
    x2 = x.reshape(N, E)
    wt = jnp.asarray(weight).T.astype(x.dtype)                 # (E, C)
    b2 = jnp.asarray(bias).reshape(1, C).astype(jnp.float32)   # f32 bias

    blk_bytes = _vmem_block_bytes(tile, E, C, in_isz, out_isz)  # incl. 2x buf
    vmem_limit = int(min(max(blk_bytes + (4 << 20), 16 << 20), vmem_cap_limit))

    out_slab_kwargs = {}
    if out_buffers != 2:
        out_slab_kwargs = dict(pipeline_mode=pl.Buffered(out_buffers))

    out2d, sat2d = pl.pallas_call(
        _constraint_kernel,
        out_shape=(
            jax.ShapeDtypeStruct((N, C * E), out_dtype),   # lane-dense slab
            jax.ShapeDtypeStruct((N, C), x.dtype),
        ),
        grid_spec=pltpu.PrefetchScalarGridSpec(
            num_scalar_prefetch=0,
            grid=grid,
            in_specs=[
                pl.BlockSpec((tile, E), lambda i: (i, 0)),     # x rows (tiled)
                pl.BlockSpec((E, C), lambda i: (0, 0)),        # W^T (resident)
                pl.BlockSpec((1, C), lambda i: (0, 0)),        # bias (resident)
            ],
            out_specs=[
                pl.BlockSpec((tile, C * E), lambda i: (i, 0), **out_slab_kwargs),
                pl.BlockSpec((tile, C), lambda i: (i, 0)),
            ],
        ),
        compiler_params=pltpu.CompilerParams(
            dimension_semantics=("parallel",),
            vmem_limit_bytes=vmem_limit,
        ),
    )(x2, wt, b2)

    out = out2d.reshape(B, S, C, E)   # contiguous reshape, free
    sat = sat2d.reshape(B, S, C)
    return out, sat


def _reference(x, weight, bias):
    scores = jnp.einsum("bse,ce->bsc", x, weight) + bias
    sat = jax.nn.sigmoid(scores)
    out = x[:, :, None, :] * sat[:, :, :, None]
    return out, sat


if __name__ == "__main__":
    key = jax.random.PRNGKey(0)
    kx, kw, kx2, kx3 = jax.random.split(key, 4)

    # Small shapes consistent with the module: batch=2, seq=8, embed_dim=32,
    # num_constraints=4.  Params mirror __init__: randn(C, E), zeros(C).
    B, S, E, C = 2, 8, 32, 4
    x = jax.random.normal(kx, (B, S, E), dtype=jnp.float32)
    constraint_weights = jax.random.normal(kw, (C, E), dtype=jnp.float32)
    constraint_bias = jnp.zeros((C,), dtype=jnp.float32)

    out, sat = logical_constraint_layer(x, constraint_weights, constraint_bias)
    out = jax.block_until_ready(out)
    sat = jax.block_until_ready(sat)
    out_ref, sat_ref = _reference(x, constraint_weights, constraint_bias)
    assert out.shape == (B, S, C, E) and sat.shape == (B, S, C)
    assert jnp.allclose(sat, sat_ref, atol=1e-5, rtol=1e-5)
    assert jnp.allclose(out, out_ref, atol=1e-5, rtol=1e-5)

    # Larger shape: exercises multi-chunk tiles and a multi-step grid.
    B2, S2 = 2, 400
    x_big = jax.random.normal(kx2, (B2, S2, E), dtype=jnp.float32)
    out_b, sat_b = logical_constraint_layer(
        x_big, constraint_weights, constraint_bias)
    out_b = jax.block_until_ready(out_b)
    sat_b = jax.block_until_ready(sat_b)
    out_bref, sat_bref = _reference(x_big, constraint_weights, constraint_bias)
    assert out_b.shape == (B2, S2, C, E) and sat_b.shape == (B2, S2, C)
    assert jnp.allclose(sat_b, sat_bref, atol=1e-5, rtol=1e-5)
    assert jnp.allclose(out_b, out_bref, atol=1e-5, rtol=1e-5)

    # Ragged row count (N not divisible by the tile): exercises the masked
    # partial last block (no padding / no output slicing in the wrapper).
    B3, S3 = 3, 77
    x_rag = jax.random.normal(kx3, (B3, S3, E), dtype=jnp.float32)
    out_r, sat_r = logical_constraint_layer(
        x_rag, constraint_weights, constraint_bias)
    out_r = jax.block_until_ready(out_r)
    sat_r = jax.block_until_ready(sat_r)
    out_rref, sat_rref = _reference(x_rag, constraint_weights, constraint_bias)
    assert out_r.shape == (B3, S3, C, E) and sat_r.shape == (B3, S3, C)
    assert jnp.allclose(sat_r, sat_rref, atol=1e-5, rtol=1e-5)
    assert jnp.allclose(out_r, out_rref, atol=1e-5, rtol=1e-5)

    # bf16 gated slab (recommended on v5e/v6e): halves the dominant HBM write.
    out_h, sat_h = logical_constraint_layer(
        x_big, constraint_weights, constraint_bias, out_dtype=jnp.bfloat16)
    out_h = jax.block_until_ready(out_h)
    sat_h = jax.block_until_ready(sat_h)
    assert out_h.dtype == jnp.bfloat16
    assert jnp.allclose(sat_h, sat_bref, atol=1e-5, rtol=1e-5)
    assert jnp.allclose(out_h.astype(jnp.float32), out_bref, atol=3e-2, rtol=3e-2)

    print("KERNEL_OK")
</pallas_src>

<mosaic_0001>
module attributes {stable_mosaic.version = 11 : i64} {
  func.func @_constraint_kernel(%arg0: i32, %arg1: memref<16x32xf32, #tpu.memory_space<vmem>>, %arg2: memref<32x4xf32, #tpu.memory_space<vmem>>, %arg3: memref<1x4xf32, #tpu.memory_space<vmem>>, %arg4: memref<16x128xf32, #tpu.memory_space<vmem>>, %arg5: memref<16x4xf32, #tpu.memory_space<vmem>>) attributes {dimension_semantics = [#tpu.dimension_semantics<parallel>], iteration_bounds = array<i64: 1>, scalar_prefetch = 0 : i64, scratch_operands = 0 : i64, tpu.core_type = #tpu.core_type<tc>, window_params = [{transform_indices = @transform_0, window_bounds = array<i64: 16, 32>}, {pipeline_mode = #tpu.pipeline_mode<synchronous>, transform_indices = @transform_1, window_bounds = array<i64: 32, 4>}, {pipeline_mode = #tpu.pipeline_mode<synchronous>, transform_indices = @transform_2, window_bounds = array<i64: 1, 4>}, {transform_indices = @transform_3, window_bounds = array<i64: 16, 128>}, {transform_indices = @transform_4, window_bounds = array<i64: 16, 4>}]} {
    %c0 = arith.constant 0 : index
    %c0_0 = arith.constant 0 : index
    %0 = vector.load %arg1[%c0, %c0_0] : memref<16x32xf32, #tpu.memory_space<vmem>>, vector<16x32xf32>
    %c0_1 = arith.constant 0 : index
    %c0_2 = arith.constant 0 : index
    %1 = vector.load %arg2[%c0_1, %c0_2] : memref<32x4xf32, #tpu.memory_space<vmem>>, vector<32x4xf32>
    %cst = arith.constant dense<0.000000e+00> : vector<16x4xf32>
    %2 = tpu.matmul %0, %1, %cst {dimension_numbers = #tpu.dot_dimension_numbers<[1], [0], [0], [1], [0, 0, 1, 1], [], []>} : vector<16x32xf32>, vector<32x4xf32>, vector<16x4xf32> -> vector<16x4xf32>
    %c0_3 = arith.constant 0 : index
    %c0_4 = arith.constant 0 : index
    %3 = vector.load %arg3[%c0_3, %c0_4] : memref<1x4xf32, #tpu.memory_space<vmem>>, vector<1x4xf32>
    %4 = vector.broadcast %3 : vector<1x4xf32> to vector<16x4xf32>
    %5 = arith.addf %2, %4 : vector<16x4xf32>
    %6 = arith.negf %5 : vector<16x4xf32>
    %7 = math.exp %6 : vector<16x4xf32>
    %cst_5 = arith.constant 1.000000e+00 : f32
    %8 = vector.broadcast %cst_5 : f32 to vector<16x4xf32>
    %9 = arith.addf %8, %7 : vector<16x4xf32>
    %10 = arith.divf %8, %9 : vector<16x4xf32>
    %c0_6 = arith.constant 0 : index
    %c0_7 = arith.constant 0 : index
    %11 = vector.load %arg5[%c0_6, %c0_7] : memref<16x4xf32, #tpu.memory_space<vmem>>, vector<16x4xf32>
    tpu.vector_store %arg5[%c0_6, %c0_7], %10 {strides = array<i32>} : memref<16x4xf32, #tpu.memory_space<vmem>>, vector<16x4xf32>,
    %c0_8 = arith.constant 0 : index
    %c0_9 = arith.constant 0 : index
    %12 = vector.load %arg1[%c0_8, %c0_9] : memref<16x32xf32, #tpu.memory_space<vmem>>, vector<16x32xf32>
    %c0_10 = arith.constant 0 : index
    %c0_11 = arith.constant 0 : index
    %13 = vector.load %arg5[%c0_10, %c0_11] : memref<16x4xf32, #tpu.memory_space<vmem>>, vector<16x4xf32>
    %14 = vector.extract_strided_slice %13 {offsets = [0, 0], sizes = [16, 1], strides = [1, 1]} : vector<16x4xf32> to vector<16x1xf32>
    %15 = vector.broadcast %14 : vector<16x1xf32> to vector<16x32xf32>
    %16 = arith.mulf %12, %15 : vector<16x32xf32>
    %17 = vector.extract_strided_slice %13 {offsets = [0, 1], sizes = [16, 1], strides = [1, 1]} : vector<16x4xf32> to vector<16x1xf32>
    %18 = vector.broadcast %17 : vector<16x1xf32> to vector<16x32xf32>
    %19 = arith.mulf %12, %18 : vector<16x32xf32>
    %20 = vector.extract_strided_slice %13 {offsets = [0, 2], sizes = [16, 1], strides = [1, 1]} : vector<16x4xf32> to vector<16x1xf32>
    %21 = vector.broadcast %20 : vector<16x1xf32> to vector<16x32xf32>
    %22 = arith.mulf %12, %21 : vector<16x32xf32>
    %23 = vector.extract_strided_slice %13 {offsets = [0, 3], sizes = [16, 1], strides = [1, 1]} : vector<16x4xf32> to vector<16x1xf32>
    %24 = vector.broadcast %23 : vector<16x1xf32> to vector<16x32xf32>
    %25 = arith.mulf %12, %24 : vector<16x32xf32>
    %26 = tpu.concatenate %16, %19, %22, %25 in 1 : vector<16x32xf32>, vector<16x32xf32>, vector<16x32xf32>, vector<16x32xf32> -> vector<16x128xf32>
    %c0_12 = arith.constant 0 : index
    %c0_13 = arith.constant 0 : index
    %27 = vector.load %arg4[%c0_12, %c0_13] : memref<16x128xf32, #tpu.memory_space<vmem>>, vector<16x128xf32>
    tpu.vector_store %arg4[%c0_12, %c0_13], %26 {strides = array<i32>} : memref<16x128xf32, #tpu.memory_space<vmem>>, vector<16x128xf32>,
    return
  }
  func.func @transform_0(%arg0: i32) -> (i32, i32) {
    %c0_i32 = arith.constant 0 : i32
    %c0_i32_0 = arith.constant 0 : i32
    return %arg0, %c0_i32 : i32, i32
  }
  func.func @transform_1(%arg0: i32) -> (i32, i32) {
    %c0_i32 = arith.constant 0 : i32
    %c0_i32_0 = arith.constant 0 : i32
    %c0_i32_1 = arith.constant 0 : i32
    return %c0_i32, %c0_i32_0 : i32, i32
  }
  func.func @transform_2(%arg0: i32) -> (i32, i32) {
    %c0_i32 = arith.constant 0 : i32
    %c0_i32_0 = arith.constant 0 : i32
    %c0_i32_1 = arith.constant 0 : i32
    return %c0_i32, %c0_i32_0 : i32, i32
  }
  func.func @transform_3(%arg0: i32) -> (i32, i32) {
    %c0_i32 = arith.constant 0 : i32
    %c0_i32_0 = arith.constant 0 : i32
    return %arg0, %c0_i32 : i32, i32
  }
  func.func @transform_4(%arg0: i32) -> (i32, i32) {
    %c0_i32 = arith.constant 0 : i32
    %c0_i32_0 = arith.constant 0 : i32
    return %arg0, %c0_i32 : i32, i32
  }
}

</mosaic_0001>

<llo_original>
// kernel: tpu_custom_call.1
$region0: #{tpu_custom_call.1}
  #allocation0 [shape = 'u32[]', space=smem, size = 0x4, offset = 0x4, fixed_abs, tag = 'smem constant byte address 0x4 - core index']
  #allocation1 [shape = 'u32[144,128]{1,0:T(1,128)}', space=vmem, size = 0x12000, scoped, tag = 'internal scratch']
  %s0 = inlined_call_operand.vmem [shape: f32[16,32], index: 0, kind: input, shape index: {}]
  %s1 = inlined_call_operand.vmem [shape: f32[32,4], index: 1, kind: input, shape index: {}]
  %s2 = inlined_call_operand.vmem [shape: f32[1,4], index: 2, kind: input, shape index: {}]
  %s3 = inlined_call_operand.hbm [shape: f32[16,128], index: 3, kind: output, shape index: {0}]
  %s4 = inlined_call_operand.vmem [shape: f32[16,4], index: 4, kind: output, shape index: {1}]
  %5 = xla_tuple %s3, %s4
  %s6 = sld [smem:[#allocation0]]
  $region30: #{tpu_custom_call.1} parent=0
    _
  %s8 = ssub.s32 1, %s6
  %s9 = scalar_select 0, %s8, %s6
  $region1: #{tpu_custom_call.1} parent=0
    #allocation2 [shape = 'u8[8192]{0}', space=vmem, size = 0x2000, scoped, tag = 'output window, operand 0, single buffered']
    #allocation3 [shape = 's32[1]{0}', space=sflag, size = 0x4, scoped, tag = 'scoped memory for tpu_custom_call.1']
    %10 = vsyncpa [#allocation3], 0
    // Predicated region
    $region2: #{tpu_custom_call.1} parent=1 // pred_check
      _
    $region3: #{tpu_custom_call.1} parent=1 // pred_check_branch
      %12 = sbr.rel (0) target = $region5
    $region4: #{tpu_custom_call.1} parent=1 // pred_region
      _
    $region5: #{tpu_custom_call.1} parent=1 // pred_fallthru
      _
    // Predicated region
    $region6: #{tpu_custom_call.1} parent=1 // pred_check
      _
    $region7: #{tpu_custom_call.1} parent=1 // pred_check_branch
      %14 = sbr.rel (0) target = $region9
    $region8: #{tpu_custom_call.1} parent=1 // pred_region
      _
    $region9: #{tpu_custom_call.1} parent=1 // pred_fallthru
      _
    // Predicated region
    $region10: #{tpu_custom_call.1} parent=1 // pred_check
      _
    $region11: #{tpu_custom_call.1} parent=1 // pred_check_branch
      %16 = sbr.rel (0) target = $region13
    $region12: #{tpu_custom_call.1} parent=1 // pred_region
      _
    $region13: #{tpu_custom_call.1} parent=1 // pred_fallthru
      _
    %v17 = vld [vmem:[%s0] sm:$0xff]
    %v18 = vld [vmem:[%s0 + $0x8] sm:$0xff]
    %v19 = vld [vmem:[%s1] sm:$0xff]
    %v20 = vld [vmem:[%s1 + $0x8] sm:$0xff]
    %v21 = vld [vmem:[%s1 + $0x10] sm:$0xff]
    %v22 = vld [vmem:[%s1 + $0x18] sm:$0xff]
    %v23 = vld [vmem:[%s2] sm:$0x1]
    %v25 = vlaneseq
    %v26 = vshrl.u32 %v25, 7
    %v27 = vsub.s32 0, %v26
    %v28 = vrot.slane %v23, %v27
    %vm30 = vcmask 261120
    %v32 = vsel %vm30, %v17, 0
    %v35 = vsel %vm30, %v18, 0
    %37 = vmatprep.subr.mxu0 0.0
    %38 = vmatpush1.msra.mxu0 %v19
    %39 = vmatprep.subr.mxu0 0.0
    %40 = vmatpush1.msra.mxu0 %v20
    %41 = vmatprep.subr.mxu0 0.0
    %42 = vmatpush1.msra.mxu0 %v21
    %43 = vmatprep.subr.mxu0 0.0
    %44 = vmatpush1.msra.mxu0 %v22
    %45 = vmatprep.subr.mxu0 0.0
    %46 = vmatpush1.msra.mxu0 0.0
    %47 = vmatprep.subr.mxu0 0.0
    %48 = vmatpush1.msra.mxu0 0.0
    %49 = vmatprep.subr.mxu0 0.0
    %50 = vmatpush1.msra.mxu0 0.0
    %51 = vmatprep.subr.mxu0 0.0
    %52 = vmatpush1.msra.mxu0 0.0
    %53 = vmatprep.subr.mxu0 0.0
    %54 = vmatpush1.msra.mxu0 0.0
    %55 = vmatprep.subr.mxu0 0.0
    %56 = vmatpush1.msra.mxu0 0.0
    %57 = vmatprep.subr.mxu0 0.0
    %58 = vmatpush1.msra.mxu0 0.0
    %59 = vmatprep.subr.mxu0 0.0
    %60 = vmatpush1.msra.mxu0 0.0
    %61 = vmatprep.subr.mxu0 0.0
    %62 = vmatpush1.msra.mxu0 0.0
    %63 = vmatprep.subr.mxu0 0.0
    %64 = vmatpush1.msra.mxu0 0.0
    %65 = vmatprep.subr.mxu0 0.0
    %66 = vmatpush1.msra.mxu0 0.0
    %67 = vmatprep.subr.mxu0 0.0
    %68 = vmatpush1.msra.mxu0 0.0
    %69 = vmatprep.subr.mxu0 0.0
    %70 = vmatpush1.msra.mxu0 0.0
    %71 = vmatprep.subr.mxu0 0.0
    %72 = vmatpush1.msra.mxu0 0.0
    %73 = vmatprep.subr.mxu0 0.0
    %74 = vmatpush1.msra.mxu0 0.0
    %75 = vmatprep.subr.mxu0 0.0
    %76 = vmatpush1.msra.mxu0 0.0
    %77 = vmatprep.subr.mxu0 0.0
    %78 = vmatpush1.msra.mxu0 0.0
    %79 = vmatprep.subr.mxu0 0.0
    %80 = vmatpush1.msra.mxu0 0.0
    %81 = vmatprep.subr.mxu0 0.0
    %82 = vmatpush1.msra.mxu0 0.0
    %83 = vmatprep.subr.mxu0 0.0
    %84 = vmatpush1.msra.mxu0 0.0
    %85 = vmatprep.subr.mxu0 0.0
    %86 = vmatpush1.msra.mxu0 0.0
    %87 = vmatprep.subr.mxu0 0.0
    %88 = vmatpush1.msra.mxu0 0.0
    %89 = vmatprep.subr.mxu0 0.0
    %90 = vmatpush1.msra.mxu0 0.0
    %91 = vmatprep.subr.mxu0 0.0
    %92 = vmatpush1.msra.mxu0 0.0
    %93 = vmatprep.subr.mxu0 0.0
    %94 = vmatpush1.msra.mxu0 0.0
    %95 = vmatprep.subr.mxu0 0.0
    %96 = vmatpush1.msra.mxu0 0.0
    %97 = vmatprep.subr.mxu0 0.0
    %98 = vmatpush1.msra.mxu0 0.0
    %99 = vmatprep.subr.mxu0 0.0
    %100 = vmatpush1.msra.mxu0 0.0
    %101 = vmatprep.mubr.f32.mxu0 0.0
    %102 = vmatmul.mubr.f32.gmra.mrb[0].mxu0 %v32
    %v103 = vpop.f32.mrb[0].mxu0
    %v104 = vadd.f32 %v28, %v103
    %v105 = vpop.f32.mrb[0].mxu0
    %106 = vmatprep.mubr.f32.mxu0 0.0
    %107 = vmatmul.mubr.f32.gmra.mrb[0].mxu0 %v35
    %v108 = vpop.f32.mrb[0].mxu0
    %v109 = vadd.f32 %v28, %v108
    %v110 = vpop.f32.mrb[0].mxu0
    %111 = vdwg.mxu0
    %v112 = vxor.u32 %v104, 2147483648
    %v113 = vxor.u32 %v109, 2147483648
    %v114 = vmul.f32 %v112, 1.442695
    %v115 = vpow.pop %v114
    %v116 = vmul.f32 %v113, 1.442695
    %v117 = vpow.pop %v116
    %v118 = vadd.f32 %v115, 1.0
    %v119 = vadd.f32 %v117, 1.0
    %v120 = vrcp.pop %v118
    %v121 = vmul.f32 1.0, %v120
    %v122 = vrcp.pop %v119
    %v123 = vmul.f32 1.0, %v122
    %vm124 = vcmask 31744
    %125 = vst.msk [vmem:[%s4] sm:$0xff] %vm124, %v121
    %126 = vst.msk [vmem:[%s4 + $0x8] sm:$0xff] %vm124, %v123
    %v127 = vld [vmem:[%s0] sm:$0xff]
    %v128 = vld [vmem:[%s0 + $0x8] sm:$0xff]
    %v129 = vld [vmem:[%s4] sm:$0xff]
    %v130 = vld [vmem:[%s4 + $0x8] sm:$0xff]
    %132 = vset.pattern.permute.xlu0 0
    %133 = vperm.xlu0 %132, %v129
    %v134 = vpop.permute.xlu0 %133
    %137 = vset.pattern.permute.xlu0 0
    %138 = vperm.xlu0 %137, %v130
    %v139 = vpop.permute.xlu0 %138
    %v141 = vmul.f32 %v127, %v134
    %v142 = vmul.f32 %v128, %v139
    %143 = vset.pattern.permute.xlu0 1
    %144 = vperm.xlu0 %143, %v129
    %v145 = vpop.permute.xlu0 %144
    %147 = vset.pattern.permute.xlu0 1
    %148 = vperm.xlu0 %147, %v130
    %v149 = vpop.permute.xlu0 %148
    %v151 = vmul.f32 %v127, %v145
    %v152 = vmul.f32 %v128, %v149
    %153 = vset.pattern.permute.xlu0 2
    %154 = vperm.xlu0 %153, %v129
    %v155 = vpop.permute.xlu0 %154
    %157 = vset.pattern.permute.xlu0 2
    %158 = vperm.xlu0 %157, %v130
    %v159 = vpop.permute.xlu0 %158
    %v161 = vmul.f32 %v127, %v155
    %v162 = vmul.f32 %v128, %v159
    %163 = vset.pattern.permute.xlu0 3
    %164 = vperm.xlu0 %163, %v129
    %v165 = vpop.permute.xlu0 %164
    %167 = vset.pattern.permute.xlu0 3
    %168 = vperm.xlu0 %167, %v130
    %v169 = vpop.permute.xlu0 %168
    %v171 = vmul.f32 %v127, %v165
    %v172 = vmul.f32 %v128, %v169
    %175 = vrot.lane.b32.xlu0 %v151, 32
    %v176 = vpop.permute.xlu0 %175
    %177 = vrot.lane.b32.xlu0 %v152, 32
    %v178 = vpop.permute.xlu0 %177
    %183 = vrot.lane.b32.xlu0 %v161, 64
    %v184 = vpop.permute.xlu0 %183
    %185 = vrot.lane.b32.xlu0 %v162, 64
    %v186 = vpop.permute.xlu0 %185
    %191 = vrot.lane.b32.xlu0 %v171, 96
    %v192 = vpop.permute.xlu0 %191
    %193 = vrot.lane.b32.xlu0 %v172, 96
    %v194 = vpop.permute.xlu0 %193
    %v197 = vsel %vm30, %v141, %v176
    %v198 = vsel %vm30, %v142, %v178
    %vm199 = vcmask 523264
    %v200 = vsel %vm199, %v197, %v184
    %v201 = vsel %vm199, %v198, %v186
    %vm202 = vcmask 785408
    %v203 = vsel %vm202, %v200, %v192
    %v204 = vsel %vm202, %v201, %v194
    %205 = vst [vmem:[#allocation2] sm:$0xff] %v203
    %206 = vst [vmem:[#allocation2 + $0x8] sm:$0xff] %v204
    // Predicated region
    $region14: #{tpu_custom_call.1} parent=1 // pred_check
      _
    $region15: #{tpu_custom_call.1} parent=1 // pred_check_branch
      %208 = sbr.rel (0) target = $region17
    $region16: #{tpu_custom_call.1} parent=1 // pred_region
      %s210 = ssub.s32 256, 256
      %211 = vsyncadd [#allocation3], %s210
      %s212 = sshll.u32 [#allocation2], 4
      %s213 = int_to_ptr.vmem [resolvable:$true] %s212
      %218 = dma.vmem_to_hbm [thread:$0]  %s213, 256, %s3, [#allocation3], 128, 128, 8
    $region17: #{tpu_custom_call.1} parent=1 // pred_fallthru
      _
    // Predicated region
    $region18: #{tpu_custom_call.1} parent=1 // pred_check
      _
    $region19: #{tpu_custom_call.1} parent=1 // pred_check_branch
      %220 = sbr.rel (0) target = $region21
    $region20: #{tpu_custom_call.1} parent=1 // pred_region
      _
    $region21: #{tpu_custom_call.1} parent=1 // pred_fallthru
      _
    // Predicated region
    $region22: #{tpu_custom_call.1} parent=1 // pred_check
      _
    $region23: #{tpu_custom_call.1} parent=1 // pred_check_branch
      %222 = sbr.rel (0) target = $region25
    $region24: #{tpu_custom_call.1} parent=1 // pred_region
      %223 = dma.done [#allocation3], 256
    $region25: #{tpu_custom_call.1} parent=1 // pred_fallthru
      _
    // Predicated region
    $region26: #{tpu_custom_call.1} parent=1 // pred_check
      _
    $region27: #{tpu_custom_call.1} parent=1 // pred_check_branch
      %225 = sbr.rel (0) target = $region29
    $region28: #{tpu_custom_call.1} parent=1 // pred_region
      _
    $region29: #{tpu_custom_call.1} parent=1 // pred_fallthru
      _
    %226 = vsyncpa [#allocation3], 1

</llo_original>
